<compile_context>
chip_gen: v6e
topology: v6e:2x2x1
jax: 0.10.0
libtpu: 0.0.40
codegen_flags: <defaults>
</compile_context>

<pallas_src>
import math

import jax
import jax.numpy as jnp
from jax.experimental import pallas as pl
from jax.experimental.pallas import tpu as pltpu


def _sinusoidal_kernel(tab_ref, x_ref, o_ref):
    """One pass: out = sin(x_expanded * freq + phase), lane-dense store.

    tab_ref : (k+1, lane) f32 VMEM  rows 0..k-1: [f|f] masked to lane slot i
                                    row  k     : phase row [0|pi/2] tiled k times
    x_ref   : (tile, k)   f32 VMEM  packed timesteps (k per output row)
    o_ref   : (tile, lane)     VMEM lane-dense output slab (lane = k*dim)
    """
    k = tab_ref.shape[0] - 1
    # Exact in-kernel slot expansion: each timestep column is broadcast across
    # the lanes and multiplied by its zero-masked frequency row; slots do not
    # overlap, so the accumulation reproduces x[r, i] * freq exactly in f32.
    theta = x_ref[:, 0:1] * tab_ref[0:1, :]
    for i in range(1, k):
        theta = theta + x_ref[:, i:i + 1] * tab_ref[i:i + 1, :]
    # Single transcendental per element (EUP); cast only at the store.
    o_ref[...] = jnp.sin(theta + tab_ref[k:k + 1, :]).astype(o_ref.dtype)


def sinusoidal_pos_emb(x: jax.Array, dim: int, *, tile_rows: int = 2048,
                       out_dtype=jnp.float32) -> jax.Array:
    """x: (B,) float timesteps -> (B, dim) embedding, [sin | cos] along dim."""
    assert dim % 2 == 0 and dim >= 4, "dim must be even and >= 4 (half_dim-1 > 0)"
    half = dim // 2
    b = x.shape[0]

    # Pack k timesteps per output row so the lane width is always a multiple
    # of 128 (unmasked vst / lane-dense DMA for any even dim).
    k = 128 // math.gcd(dim, 128)
    lane = k * dim

    # Sublane granule for the output dtype (8 for f32, 16 for bf16, 32 for i8).
    sub = max(8, 32 // jnp.dtype(out_dtype).itemsize)

    rows = pl.cdiv(b, k)  # packed rows needed

    # Tile rows: as large as a ~4 MiB output block allows (amortizes the
    # ~0.35 us per-grid-step overhead, stays well under the scoped VMEM limit
    # with double buffering), but split so the "parallel" axis has >= 2 grid
    # steps when there is enough work (two TensorCores on v7x).
    vmem_rows = max(sub, ((4 << 20) // (lane * 4)) // sub * sub)
    tile_cap = max(sub, (min(tile_rows, vmem_rows) // sub) * sub)
    half_rows = max(sub, pl.cdiv(pl.cdiv(rows, 2), sub) * sub)
    tile = min(tile_cap, half_rows)
    grid_rows = pl.cdiv(rows, tile)
    rows_padded = grid_rows * tile
    b_padded = rows_padded * k

    # Frequency / phase table -- built once, resident in VMEM across the grid
    # (constant index_map => one tiny DMA, no per-step iota/exp).
    scale = math.log(10000.0) / (half - 1)
    f = jnp.exp(-scale * jnp.arange(half, dtype=jnp.float32))          # (half,)
    freq_row = jnp.concatenate([f, f])                                 # (dim,)
    slot_mask = jnp.eye(k, dtype=jnp.float32)                          # (k, k)
    fmat = (slot_mask[:, :, None] * freq_row[None, None, :]).reshape(k, lane)
    phase_row = jnp.tile(
        jnp.concatenate([jnp.zeros((half,), jnp.float32),
                         jnp.full((half,), jnp.pi / 2, jnp.float32)]),
        k).reshape(1, lane)
    table = jnp.concatenate([fmat, phase_row], axis=0)                 # (k+1, lane)

    # Compact packed timesteps -- no broadcast-expanded intermediate in HBM.
    xp = jnp.zeros((b_padded,), jnp.float32).at[:b].set(x.astype(jnp.float32))
    xp = xp.reshape(rows_padded, k)

    out = pl.pallas_call(
        _sinusoidal_kernel,
        out_shape=jax.ShapeDtypeStruct((rows_padded, lane), out_dtype),
        grid=(grid_rows,),
        in_specs=[
            pl.BlockSpec((k + 1, lane), lambda i: (0, 0)),   # resident table
            pl.BlockSpec((tile, k), lambda i: (i, 0)),       # packed timesteps
        ],
        out_specs=pl.BlockSpec((tile, lane), lambda i: (i, 0)),
        compiler_params=pltpu.CompilerParams(
            dimension_semantics=("parallel",)),
    )(table, xp)

    # Unpack the lane-dense slab back to the PyTorch layout (trivial reshape).
    return out.reshape(b_padded, dim)[:b]


def sinusoidal_pos_emb_ref(x: jax.Array, dim: int) -> jax.Array:
    """Pure-JAX reference mirroring the PyTorch forward."""
    half_dim = dim // 2
    scale = math.log(10000.0) / (half_dim - 1)
    emb = jnp.exp(jnp.arange(half_dim, dtype=jnp.float32) * -scale)
    emb = x.astype(jnp.float32)[:, None] * emb[None, :]
    return jnp.concatenate([jnp.sin(emb), jnp.cos(emb)], axis=-1)


if __name__ == "__main__":
    key = jax.random.PRNGKey(0)

    # Small config matching typical diffusion-timestep use.
    batch, dim = 8, 32
    x = jax.random.uniform(key, (batch,), dtype=jnp.float32) * 1000.0
    out = jax.block_until_ready(sinusoidal_pos_emb(x, dim))
    ref = sinusoidal_pos_emb_ref(x, dim)
    assert out.shape == (batch, dim), out.shape
    # sin(theta + pi/2) vs cos(theta) at theta ~ 1e3 differs by ~|theta|*eps
    # ~ 1e-4 of argument; tolerance sits above that and below formula error.
    assert jnp.allclose(out, ref, atol=5e-3, rtol=0.0), \
        float(jnp.max(jnp.abs(out - ref)))

    # Larger batch: exercises the multi-step tiled grid (>= 2 parallel steps).
    b2, d2 = 4100, 64
    x2 = jax.random.uniform(jax.random.PRNGKey(1), (b2,), dtype=jnp.float32) * 1000.0
    out2 = jax.block_until_ready(sinusoidal_pos_emb(x2, d2))
    ref2 = sinusoidal_pos_emb_ref(x2, d2)
    assert out2.shape == (b2, d2), out2.shape
    assert jnp.allclose(out2, ref2, atol=5e-3, rtol=0.0), \
        float(jnp.max(jnp.abs(out2 - ref2)))

    # dim that does not divide 128: generalized lane packing (k=4, lane=384).
    b3, d3 = 100, 96
    x3 = jax.random.uniform(jax.random.PRNGKey(2), (b3,), dtype=jnp.float32) * 1000.0
    out3 = jax.block_until_ready(sinusoidal_pos_emb(x3, d3))
    ref3 = sinusoidal_pos_emb_ref(x3, d3)
    assert out3.shape == (b3, d3), out3.shape
    assert jnp.allclose(out3, ref3, atol=5e-3, rtol=0.0), \
        float(jnp.max(jnp.abs(out3 - ref3)))

    # bf16 output path (halves the dominant HBM stream; arithmetic stays f32).
    out4 = jax.block_until_ready(
        sinusoidal_pos_emb(x2, d2, out_dtype=jnp.bfloat16))
    assert out4.dtype == jnp.bfloat16 and out4.shape == (b2, d2)
    assert jnp.allclose(out4.astype(jnp.float32), ref2, atol=2e-2, rtol=0.0)

    print("KERNEL_OK")
</pallas_src>

<mosaic_0001>
module attributes {stable_mosaic.version = 11 : i64} {
  func.func @_sinusoidal_kernel(%arg0: i32, %arg1: memref<5x128xf32, #tpu.memory_space<vmem>>, %arg2: memref<8x4xf32, #tpu.memory_space<vmem>>, %arg3: memref<8x128xf32, #tpu.memory_space<vmem>>) attributes {dimension_semantics = [#tpu.dimension_semantics<parallel>], iteration_bounds = array<i64: 1>, scalar_prefetch = 0 : i64, scratch_operands = 0 : i64, tpu.core_type = #tpu.core_type<tc>, window_params = [{pipeline_mode = #tpu.pipeline_mode<synchronous>, transform_indices = @transform_0, window_bounds = array<i64: 5, 128>}, {transform_indices = @transform_1, window_bounds = array<i64: 8, 4>}, {transform_indices = @transform_2, window_bounds = array<i64: 8, 128>}]} {
    %c0 = arith.constant 0 : index
    %c0_0 = arith.constant 0 : index
    %0 = vector.load %arg2[%c0, %c0_0] : memref<8x4xf32, #tpu.memory_space<vmem>>, vector<8x1xf32>
    %c0_1 = arith.constant 0 : index
    %c0_2 = arith.constant 0 : index
    %1 = vector.load %arg1[%c0_1, %c0_2] : memref<5x128xf32, #tpu.memory_space<vmem>>, vector<1x128xf32>
    %2 = vector.broadcast %0 : vector<8x1xf32> to vector<8x128xf32>
    %3 = vector.broadcast %1 : vector<1x128xf32> to vector<8x128xf32>
    %4 = arith.mulf %2, %3 : vector<8x128xf32>
    %c0_3 = arith.constant 0 : index
    %c1 = arith.constant 1 : index
    %5 = vector.load %arg2[%c0_3, %c1] : memref<8x4xf32, #tpu.memory_space<vmem>>, vector<8x1xf32>
    %c1_4 = arith.constant 1 : index
    %c0_5 = arith.constant 0 : index
    %6 = vector.load %arg1[%c1_4, %c0_5] : memref<5x128xf32, #tpu.memory_space<vmem>>, vector<1x128xf32>
    %7 = vector.broadcast %5 : vector<8x1xf32> to vector<8x128xf32>
    %8 = vector.broadcast %6 : vector<1x128xf32> to vector<8x128xf32>
    %9 = arith.mulf %7, %8 : vector<8x128xf32>
    %10 = arith.addf %4, %9 : vector<8x128xf32>
    %c0_6 = arith.constant 0 : index
    %c2 = arith.constant 2 : index
    %11 = vector.load %arg2[%c0_6, %c2] : memref<8x4xf32, #tpu.memory_space<vmem>>, vector<8x1xf32>
    %c2_7 = arith.constant 2 : index
    %c0_8 = arith.constant 0 : index
    %12 = vector.load %arg1[%c2_7, %c0_8] : memref<5x128xf32, #tpu.memory_space<vmem>>, vector<1x128xf32>
    %13 = vector.broadcast %11 : vector<8x1xf32> to vector<8x128xf32>
    %14 = vector.broadcast %12 : vector<1x128xf32> to vector<8x128xf32>
    %15 = arith.mulf %13, %14 : vector<8x128xf32>
    %16 = arith.addf %10, %15 : vector<8x128xf32>
    %c0_9 = arith.constant 0 : index
    %c3 = arith.constant 3 : index
    %17 = vector.load %arg2[%c0_9, %c3] : memref<8x4xf32, #tpu.memory_space<vmem>>, vector<8x1xf32>
    %c3_10 = arith.constant 3 : index
    %c0_11 = arith.constant 0 : index
    %18 = vector.load %arg1[%c3_10, %c0_11] : memref<5x128xf32, #tpu.memory_space<vmem>>, vector<1x128xf32>
    %19 = vector.broadcast %17 : vector<8x1xf32> to vector<8x128xf32>
    %20 = vector.broadcast %18 : vector<1x128xf32> to vector<8x128xf32>
    %21 = arith.mulf %19, %20 : vector<8x128xf32>
    %22 = arith.addf %16, %21 : vector<8x128xf32>
    %c4 = arith.constant 4 : index
    %c0_12 = arith.constant 0 : index
    %23 = vector.load %arg1[%c4, %c0_12] : memref<5x128xf32, #tpu.memory_space<vmem>>, vector<1x128xf32>
    %24 = vector.broadcast %23 : vector<1x128xf32> to vector<8x128xf32>
    %25 = arith.addf %22, %24 : vector<8x128xf32>
    %26 = math.sin %25 : vector<8x128xf32>
    %c0_13 = arith.constant 0 : index
    %c0_14 = arith.constant 0 : index
    %27 = vector.load %arg3[%c0_13, %c0_14] : memref<8x128xf32, #tpu.memory_space<vmem>>, vector<8x128xf32>
    tpu.vector_store %arg3[%c0_13, %c0_14], %26 {strides = array<i32>} : memref<8x128xf32, #tpu.memory_space<vmem>>, vector<8x128xf32>,
    return
  }
  func.func @transform_0(%arg0: i32) -> (i32, i32) {
    %c0_i32 = arith.constant 0 : i32
    %c0_i32_0 = arith.constant 0 : i32
    %c0_i32_1 = arith.constant 0 : i32
    return %c0_i32, %c0_i32_0 : i32, i32
  }
  func.func @transform_1(%arg0: i32) -> (i32, i32) {
    %c0_i32 = arith.constant 0 : i32
    %c0_i32_0 = arith.constant 0 : i32
    return %arg0, %c0_i32 : i32, i32
  }
  func.func @transform_2(%arg0: i32) -> (i32, i32) {
    %c0_i32 = arith.constant 0 : i32
    %c0_i32_0 = arith.constant 0 : i32
    return %arg0, %c0_i32 : i32, i32
  }
}

</mosaic_0001>

<llo_original>
// kernel: tpu_custom_call.1
$region0: #{tpu_custom_call.1}
  #allocation0 [shape = 'u32[]', space=smem, size = 0x4, offset = 0x4, fixed_abs, tag = 'smem constant byte address 0x4 - core index']
  #allocation1 [shape = 'u32[144,128]{1,0:T(1,128)}', space=vmem, size = 0x12000, scoped, tag = 'internal scratch']
  %s0 = inlined_call_operand.vmem [shape: f32[5,128], index: 0, kind: input, shape index: {}]
  %s1 = inlined_call_operand.vmem [shape: f32[8,4], index: 1, kind: input, shape index: {}]
  %s2 = inlined_call_operand.hbm [shape: f32[8,128], index: 2, kind: output, shape index: {}]
  %s3 = sld [smem:[#allocation0]]
  $region18: #{tpu_custom_call.1} parent=0
    _
  %s5 = ssub.s32 1, %s3
  %s6 = scalar_select 0, %s5, %s3
  $region1: #{tpu_custom_call.1} parent=0
    #allocation2 [shape = 'u8[4096]{0}', space=vmem, size = 0x1000, scoped, tag = 'output window, operand 0, single buffered']
    #allocation3 [shape = 's32[1]{0}', space=sflag, size = 0x4, scoped, tag = 'scoped memory for tpu_custom_call.1']
    %7 = vsyncpa [#allocation3], 0
    // Predicated region
    $region2: #{tpu_custom_call.1} parent=1 // pred_check
      _
    $region3: #{tpu_custom_call.1} parent=1 // pred_check_branch
      %9 = sbr.rel (0) target = $region5
    $region4: #{tpu_custom_call.1} parent=1 // pred_region
      _
    $region5: #{tpu_custom_call.1} parent=1 // pred_fallthru
      _
    // Predicated region
    $region6: #{tpu_custom_call.1} parent=1 // pred_check
      _
    $region7: #{tpu_custom_call.1} parent=1 // pred_check_branch
      %11 = sbr.rel (0) target = $region9
    $region8: #{tpu_custom_call.1} parent=1 // pred_region
      _
    $region9: #{tpu_custom_call.1} parent=1 // pred_fallthru
      _
    %v12 = vld [vmem:[%s1] sm:$0xff]
    %v13 = vld [vmem:[%s0] sm:$0x1]
    %15 = vset.pattern.permute.xlu0 0
    %16 = vperm.xlu0 %15, %v12
    %v17 = vpop.permute.xlu0 %16
    %v19 = vlaneseq
    %v20 = vshrl.u32 %v19, 7
    %v21 = vsub.s32 0, %v20
    %v22 = vrot.slane %v13, %v21
    %v23 = vmul.f32 %v17, %v22
    %v24 = vld [vmem:[%s0 + $0x1] sm:$0x1]
    %25 = vset.pattern.permute.xlu0 1
    %26 = vperm.xlu0 %25, %v12
    %v27 = vpop.permute.xlu0 %26
    %v29 = vlaneseq
    %v30 = vshrl.u32 %v29, 7
    %v31 = vsub.s32 0, %v30
    %v32 = vrot.slane %v24, %v31
    %v33 = vmul.f32 %v27, %v32
    %v34 = vadd.f32 %v23, %v33
    %v35 = vld [vmem:[%s0 + $0x2] sm:$0x1]
    %36 = vset.pattern.permute.xlu0 2
    %37 = vperm.xlu0 %36, %v12
    %v38 = vpop.permute.xlu0 %37
    %v40 = vlaneseq
    %v41 = vshrl.u32 %v40, 7
    %v42 = vsub.s32 0, %v41
    %v43 = vrot.slane %v35, %v42
    %v44 = vmul.f32 %v38, %v43
    %v45 = vadd.f32 %v34, %v44
    %v46 = vld [vmem:[%s0 + $0x3] sm:$0x1]
    %47 = vset.pattern.permute.xlu0 3
    %48 = vperm.xlu0 %47, %v12
    %v49 = vpop.permute.xlu0 %48
    %v51 = vlaneseq
    %v52 = vshrl.u32 %v51, 7
    %v53 = vsub.s32 0, %v52
    %v54 = vrot.slane %v46, %v53
    %v55 = vmul.f32 %v49, %v54
    %v56 = vadd.f32 %v45, %v55
    %v57 = vld [vmem:[%s0 + $0x4] sm:$0x1]
    %v58 = vlaneseq
    %v59 = vshrl.u32 %v58, 7
    %v60 = vsub.s32 0, %v59
    %v61 = vrot.slane %v57, %v60
    %v62 = vadd.f32 %v56, %v61
    %v63 = vand.u32 2147483647, %v62
    %vm64 = vcmp.le.f32.partialorder %v63, 0.7853982
    %vm65 = vcmp.lt.s32.totalorder %v62, 0
    %v66 = vand.u32 %v62, 2139095040
    %v67 = vshrl.u32 %v66, 23
    %v68 = vsub.s32 %v67, 127
    %v69 = vand.u32 2147483647, %v62
    %v70 = vand.u32 %v69, 8388607
    %v71 = vor.u32 %v70, 8388608
    %v72 = vsub.s32 0, %v71
    %v73 = vadd.s32 %v68, 1
    %vm74 = vcmp.gt.s32.totalorder %v73, 0
    %v75 = vsel %vm74, %v73, 0
    %v76 = vshrl.u32 %v75, 5
    %v77 = vand.u32 %v75, 31
    %v78 = vsub.s32 32, %v77
    %v79 = vshrl.u32 683565275, %v78
    %v80 = vshll.u32 683565275, %v77
    %v81 = vshrl.u32 2475754826, %v78
    %v82 = vor.u32 %v80, %v81
    %v83 = vshll.u32 2475754826, %v77
    %v84 = vshrl.u32 2131351028, %v78
    %v85 = vor.u32 %v83, %v84
    %v86 = vshll.u32 2131351028, %v77
    %v87 = vshrl.u32 2102212464, %v78
    %v88 = vor.u32 %v86, %v87
    %v89 = vshll.u32 2102212464, %v77
    %v90 = vshrl.u32 920167782, %v78
    %v91 = vor.u32 %v89, %v90
    %v92 = vshll.u32 920167782, %v77
    %v93 = vshrl.u32 1326507024, %v78
    %v94 = vor.u32 %v92, %v93
    %vm95 = vcmp.lt.s32.totalorder %v76, 1
    %vm96 = vcmp.lt.s32.totalorder %v76, 2
    %vm97 = vcmp.lt.s32.totalorder %v76, 3
    %vm98 = vcmp.lt.s32.totalorder %v76, 4
    %v99 = vsel %vm95, %v79, %v82
    %v100 = vsel %vm98, %v88, 2102212464
    %v101 = vsel %vm97, %v85, %v100
    %v102 = vsel %vm96, %v99, %v101
    %v103 = vsel %vm95, %v82, %v85
    %v104 = vsel %vm98, %v91, 920167782
    %v105 = vsel %vm97, %v88, %v104
    %v106 = vsel %vm96, %v103, %v105
    %v107 = vsel %vm95, %v85, %v88
    %v108 = vsel %vm98, %v94, 1326507024
    %v109 = vsel %vm97, %v91, %v108
    %v110 = vsel %vm96, %v107, %v109
    %v111 = vshll.u32 %v71, 8
    %v112 = vmul.u32.u64.compose %v111, %v110
    %v113 = vextract.low.u32 %v112
    %v114 = vextract.high.u32 %v112
    %v115 = vmul.u32.u64.compose %v111, %v106
    %v116 = vextract.low.u32 %v115
    %v117 = vextract.high.u32 %v115
    %v118 = vmul.u32 %v111, %v102
    %v119 = vadd.s32 %v114, %v116
    %vm120 = vc.u32 %v114, %v116
    %v121 = vadd.s32 %v117, 1
    %v122 = vsel %vm120, %v121, %v117
    %v123 = vadd.s32 %v118, %v122
    %v124 = vadd.s32 %v123, 536870912
    %v125 = vshrl.u32 %v124, 30
    %v126 = vshll.u32 %v125, 30
    %v127 = vsub.s32 %v123, %v126
    %vm128 = vcmp.lt.s32.totalorder %v127, 0
    %v129 = vsub.s32 0, %v127
    %v130 = vsel %vm128, %v129, %v127
    %v131 = vclz %v130
    %v132 = vsub.s32 %v131, 2
    %vm133 = vcmp.gt.s32.totalorder 0, %v132
    %v134 = vsel %vm133, 0, %v132
    %v135 = vsub.s32 32, %v134
    %v136 = vshll.u32 %v127, %v134
    %v137 = vshrl.u32 %v119, %v135
    %v138 = vor.u32 %v136, %v137
    %v139 = vsub.s32 4294967266, %v134
    %v140 = vadd.s32 %v139, 127
    %v141 = vshll.u32 %v140, 23
    %v142 = vor.u32 4788187, %v141
    %v143 = vand.u32 2147483647, %v142
    %v145 = vcvt.s32.f32 %v138
    %v146 = vmul.f32 %v145, %v143
    %v147 = vxor.u32 %v146, 2147483648
    %v148 = vsel %vm65, %v147, %v146
    %v149 = vsub.s32 4, %v125
    %v150 = vsel %vm65, %v149, %v125
    %v151 = vsel %vm64, %v62, %v148
    %v152 = vsel %vm64, 0, %v150
    %v153 = vcosq.f32.pop %v151
    %v154 = vsinq.f32.pop %v151
    %vm155 = vweird.f32 %v62
    %v156 = vadd.s32 %v152, 3
    %v157 = vand.u32 %v156, 3
    %vm158 = vcmp.lt.s32.totalorder %v157, 2
    %vm159 = vcmp.eq.s32.totalorder %v157, 0
    %v160 = vxor.u32 %v154, 2147483648
    %v161 = vsel %vm159, %v153, %v160
    %vm162 = vcmp.eq.s32.totalorder %v157, 2
    %v163 = vxor.u32 %v153, 2147483648
    %v164 = vsel %vm162, %v163, %v154
    %v165 = vsel %vm158, %v161, %v164
    %v166 = vsel %vm155, nan, %v165
    %167 = vst [vmem:[#allocation2] sm:$0xff] %v166
    // Predicated region
    $region10: #{tpu_custom_call.1} parent=1 // pred_check
      _
    $region11: #{tpu_custom_call.1} parent=1 // pred_check_branch
      %169 = sbr.rel (0) target = $region13
    $region12: #{tpu_custom_call.1} parent=1 // pred_region
      %s171 = ssub.s32 128, 128
      %172 = vsyncadd [#allocation3], %s171
      %s174 = sshll.u32 [#allocation2], 4
      %s175 = int_to_ptr.vmem [resolvable:$true] %s174
      %177 = dma.vmem_to_hbm [thread:$0]  %s175, 128, %s2, [#allocation3]
    $region13: #{tpu_custom_call.1} parent=1 // pred_fallthru
      _
    // Predicated region
    $region14: #{tpu_custom_call.1} parent=1 // pred_check
      _
    $region15: #{tpu_custom_call.1} parent=1 // pred_check_branch
      %179 = sbr.rel (0) target = $region17
    $region16: #{tpu_custom_call.1} parent=1 // pred_region
      %180 = dma.done [#allocation3], 128
    $region17: #{tpu_custom_call.1} parent=1 // pred_fallthru
      _
    %181 = vsyncpa [#allocation3], 1

</llo_original>
